<compile_context>
chip_gen: v5e
topology: v5e:2x2
jax: 0.10.0
libtpu: 0.0.40
codegen_flags: <defaults>
</compile_context>

<pallas_src>
import functools

import jax
import jax.numpy as jnp
from jax import lax
from jax.experimental import pallas as pl
from jax.experimental.pallas import tpu as pltpu


# --------------------------- weight preprocessing --------------------------- #
def _pack_conv_weight(w_hwio, W):
    """Fold the circular kw-shift + channel mixing into one matrix.

    w_hwio: (3, 3, Cin, Cout).  Returns (3*W*Cin, W*Cout) such that, with the
    packed activation layout lane = w*Cin + ci,

      out[h, w*Cout+co] = sum_kh taps_kh[h, :] @ M[kh*W*Cin:(kh+1)*W*Cin, w*Cout+co]
      taps_kh[h, w'*Cin+ci] = x[(h+kh-1) % H, w', ci]

    reproduces nn.Conv2d (cross-correlation) with circular padding=1, stride=1.
    """
    ksz_h, ksz_w, cin, cout = w_hwio.shape
    blocks = []
    for kh in range(ksz_h):
        m = jnp.zeros((W * cin, W * cout), jnp.float32)
        for kw in range(ksz_w):
            # P[w', w] = 1  iff  w' == (w + kw - 1) % W
            perm = jnp.roll(jnp.eye(W, dtype=jnp.float32), kw - 1, axis=0)
            m = m + jnp.kron(perm, w_hwio[kh, kw].astype(jnp.float32))
        blocks.append(m)
    return jnp.concatenate(blocks, axis=0)


def pack_params(w1_oihw, b1, w2_oihw, b2, W):
    """One-time parameter preprocessing (NOT in the per-call hot path)."""
    assert W >= 3, "block-circulant packing of the 3x3 circular conv needs W >= 3"
    cout = w1_oihw.shape[0]
    # OIHW -> HWIO, fold into block-circulant matrix, pre-cast to bf16 (MXU op).
    w1p = _pack_conv_weight(jnp.transpose(w1_oihw, (2, 3, 1, 0)), W).astype(jnp.bfloat16)
    w2p = _pack_conv_weight(jnp.transpose(w2_oihw, (2, 3, 1, 0)), W).astype(jnp.bfloat16)
    # Lane-dense biases: lane w*Cout + co holds b[co].  Kept in f32 (epilogue).
    b1p = jnp.tile(b1.astype(jnp.float32), W).reshape(1, W * cout)
    b2p = jnp.tile(b2.astype(jnp.float32), W).reshape(1, W * cout)
    return w1p, b1p, w2p, b2p


# --------------------------------- kernel ----------------------------------- #
def _resblock_kernel(x_ref, w1_ref, b1_ref, w2_ref, b2_ref, o_ref, *,
                     num_repeat, split_taps):
    nb, h, wc = x_ref.shape
    m = nb * h

    # Hoist the lane-dense bias broadcasts once (reused across convs/repeats).
    b1 = jnp.broadcast_to(b1_ref[...].astype(jnp.float32), (m, wc))
    b2 = jnp.broadcast_to(b2_ref[...].astype(jnp.float32), (m, wc))

    def circ_conv3x3(a3, w_ref, bias2):
        # a3: (nb, h, wc) f32.  kh=0 tap reads rows (h-1)%H, kh=2 reads (h+1)%H
        # (circular padding=1 along H); rolls are per-sample (axis=1).
        up = jnp.roll(a3, 1, axis=1)
        dn = jnp.roll(a3, -1, axis=1)
        if split_taps:
            # v5e-friendly: three accumulated K=wc dots (no taps concat stores).
            acc = bias2
            for kh, tap in enumerate((up, a3, dn)):
                t = tap.reshape(m, wc).astype(jnp.bfloat16)
                acc = acc + jnp.dot(t, w_ref[pl.ds(kh * wc, wc), :],
                                    preferred_element_type=jnp.float32)
        else:
            # v6e/v7x: one K=3*wc MXU matmul per conv.
            taps = jnp.concatenate([up, a3, dn], axis=-1)
            taps = taps.reshape(m, 3 * wc).astype(jnp.bfloat16)
            acc = bias2 + jnp.dot(taps, w_ref[...],
                                  preferred_element_type=jnp.float32)
        return acc.reshape(nb, h, wc)

    def repeat_body(a3):
        y = jnp.maximum(circ_conv3x3(a3, w1_ref, b1), 0.0)   # cnn1: conv+bias+ReLU
        y = circ_conv3x3(y, w2_ref, b2)                      # cnn2: conv+bias
        return jnp.maximum(y + a3, 0.0)                      # shortcut + ReLU

    # numRepeat fused inside the kernel: activation never leaves VMEM.
    x = x_ref[...].astype(jnp.float32)
    if num_repeat <= 4:
        for _ in range(num_repeat):
            x = repeat_body(x)
    else:
        x = lax.fori_loop(0, num_repeat, lambda _, v: repeat_body(v), x)

    o_ref[...] = x.astype(o_ref.dtype)


# -------------------------------- wrappers ---------------------------------- #
def residual_block_packed(x_packed, w1p, b1p, w2p, b2p, *, num_repeat,
                          batch_block=None, split_taps=False):
    """Fused residual block on packed activations (N, H, W*C)."""
    N, H, WC = x_packed.shape
    nb = N if batch_block is None else batch_block
    assert N % nb == 0, "batch_block must divide N"
    kernel = functools.partial(_resblock_kernel, num_repeat=num_repeat,
                               split_taps=split_taps)
    return pl.pallas_call(
        kernel,
        out_shape=jax.ShapeDtypeStruct((N, H, WC), x_packed.dtype),
        grid=(N // nb,),
        in_specs=[
            pl.BlockSpec((nb, H, WC), lambda n: (n, 0, 0)),     # activation block
            pl.BlockSpec((3 * WC, WC), lambda n: (0, 0)),       # packed w1 (bf16)
            pl.BlockSpec((1, WC), lambda n: (0, 0)),            # packed b1 (f32)
            pl.BlockSpec((3 * WC, WC), lambda n: (0, 0)),       # packed w2 (bf16)
            pl.BlockSpec((1, WC), lambda n: (0, 0)),            # packed b2 (f32)
        ],
        out_specs=pl.BlockSpec((nb, H, WC), lambda n: (n, 0, 0)),
        compiler_params=pltpu.CompilerParams(
            dimension_semantics=("parallel",),   # shard batch blocks across v7x TCs
        ),
    )(x_packed, w1p, b1p, w2p, b2p)


@functools.partial(jax.jit,
                   static_argnames=("num_repeat", "batch_block", "split_taps"))
def residual_block_nd(x_nchw, w1p, b1p, w2p, b2p, num_repeat=2,
                      batch_block=None, split_taps=False):
    """PyTorch-layout (NCHW) interface.  The transposes here are boundary
    plumbing only; prefer residual_block_packed + keeping activations packed."""
    N, C, H, W = x_nchw.shape
    WC = W * C
    assert w1p.shape == (3 * WC, WC) and w2p.shape == (3 * WC, WC)
    x_packed = jnp.transpose(x_nchw, (0, 2, 3, 1)).reshape(N, H, WC)
    out = residual_block_packed(x_packed, w1p, b1p, w2p, b2p,
                                num_repeat=num_repeat,
                                batch_block=batch_block,
                                split_taps=split_taps)
    return jnp.transpose(out.reshape(N, H, W, C), (0, 3, 1, 2))


# ------------------------- pure-JAX f32 reference --------------------------- #
def _conv_circ_ref(x, w_oihw, b):
    xp = jnp.pad(x, ((0, 0), (0, 0), (1, 1), (1, 1)), mode="wrap")
    y = lax.conv_general_dilated(
        xp, w_oihw, window_strides=(1, 1), padding="VALID",
        dimension_numbers=("NCHW", "OIHW", "NCHW"))
    return y + b.reshape(1, -1, 1, 1)


def _reference(x, w1, b1, w2, b2, num_repeat):
    for _ in range(num_repeat):
        r = x
        x = jnp.maximum(_conv_circ_ref(x, w1, b1), 0.0)
        x = _conv_circ_ref(x, w2, b2)
        x = jnp.maximum(x + r, 0.0)
    return x


if __name__ == "__main__":
    # ResidualBlockNd(nDIM=2, numRepeat=2, in_channels=8, out_channels=8,
    #                 kernel_size=3, stride=1, padding=1,
    #                 padding_mode='circular', bias=True, bRelu=True, bNorm=False)
    N, C, H, W = 2, 8, 16, 16            # W*C = 128 -> fully lane-dense vregs
    num_repeat = 2

    key = jax.random.PRNGKey(0)
    kx, k1, k2, k3, k4 = jax.random.split(key, 5)

    x_nchw = jax.random.normal(kx, (N, C, H, W), jnp.float32)
    # PyTorch-layout parameters (OIHW weights, (C,) biases).
    w1 = 0.1 * jax.random.normal(k1, (C, C, 3, 3), jnp.float32)
    b1 = 0.1 * jax.random.normal(k2, (C,), jnp.float32)
    w2 = 0.1 * jax.random.normal(k3, (C, C, 3, 3), jnp.float32)
    b2 = 0.1 * jax.random.normal(k4, (C,), jnp.float32)

    # One-time parameter packing (outside the per-call hot path).
    w1p, b1p, w2p, b2p = pack_params(w1, b1, w2, b2, W)

    ref = _reference(x_nchw, w1, b1, w2, b2, num_repeat)
    ref_scale = float(jnp.max(jnp.abs(ref))) + 1e-6
    tol = 2e-2   # bf16 MXU operands with f32 accumulation

    # Default path: single grid step, one K=3*W*C matmul per conv (v6e/v7x).
    out = jax.block_until_ready(
        residual_block_nd(x_nchw, w1p, b1p, w2p, b2p, num_repeat=num_repeat))
    err = float(jnp.max(jnp.abs(out - ref))) / ref_scale
    assert err < tol, f"default path mismatch vs reference: rel err {err}"

    # v5e-style path: three accumulated K=W*C dots (no taps concat).
    out_s = jax.block_until_ready(
        residual_block_nd(x_nchw, w1p, b1p, w2p, b2p, num_repeat=num_repeat,
                          split_taps=True))
    err_s = float(jnp.max(jnp.abs(out_s - ref))) / ref_scale
    assert err_s < tol, f"split_taps path mismatch vs reference: rel err {err_s}"

    # v7x-style path: 2 grid blocks so both TensorCores get work.
    out_m = jax.block_until_ready(
        residual_block_nd(x_nchw, w1p, b1p, w2p, b2p, num_repeat=num_repeat,
                          batch_block=1))
    err_m = float(jnp.max(jnp.abs(out_m - ref))) / ref_scale
    assert err_m < tol, f"batch_block path mismatch vs reference: rel err {err_m}"

    # TODO(synk): bNorm=True (BatchNorm) and the stride!=1 / cin!=cout
    # projection-shortcut variants are not exercised by this config and are
    # not implemented in the kernel.
    print("KERNEL_OK")
</pallas_src>

<mosaic_0001>
module attributes {stable_mosaic.version = 11 : i64} {
  func.func @_resblock_kernel(%arg0: i32, %arg1: memref<2x16x128xf32, #tpu.memory_space<vmem>>, %arg2: memref<384x128xbf16, #tpu.memory_space<vmem>>, %arg3: memref<1x128xf32, #tpu.memory_space<vmem>>, %arg4: memref<384x128xbf16, #tpu.memory_space<vmem>>, %arg5: memref<1x128xf32, #tpu.memory_space<vmem>>, %arg6: memref<2x16x128xf32, #tpu.memory_space<vmem>>) attributes {dimension_semantics = [#tpu.dimension_semantics<parallel>], iteration_bounds = array<i64: 1>, scalar_prefetch = 0 : i64, scratch_operands = 0 : i64, tpu.core_type = #tpu.core_type<tc>, window_params = [{transform_indices = @transform_0, window_bounds = array<i64: 2, 16, 128>}, {pipeline_mode = #tpu.pipeline_mode<synchronous>, transform_indices = @transform_1, window_bounds = array<i64: 384, 128>}, {pipeline_mode = #tpu.pipeline_mode<synchronous>, transform_indices = @transform_2, window_bounds = array<i64: 1, 128>}, {pipeline_mode = #tpu.pipeline_mode<synchronous>, transform_indices = @transform_3, window_bounds = array<i64: 384, 128>}, {pipeline_mode = #tpu.pipeline_mode<synchronous>, transform_indices = @transform_4, window_bounds = array<i64: 1, 128>}, {transform_indices = @transform_5, window_bounds = array<i64: 2, 16, 128>}]} {
    %c0 = arith.constant 0 : index
    %c0_0 = arith.constant 0 : index
    %0 = vector.load %arg3[%c0, %c0_0] : memref<1x128xf32, #tpu.memory_space<vmem>>, vector<1x128xf32>
    %1 = vector.shape_cast %0 : vector<1x128xf32> to vector<1x128xf32>
    %2 = vector.broadcast %1 : vector<1x128xf32> to vector<32x128xf32>
    %c0_1 = arith.constant 0 : index
    %c0_2 = arith.constant 0 : index
    %3 = vector.load %arg5[%c0_1, %c0_2] : memref<1x128xf32, #tpu.memory_space<vmem>>, vector<1x128xf32>
    %4 = vector.shape_cast %3 : vector<1x128xf32> to vector<1x128xf32>
    %5 = vector.broadcast %4 : vector<1x128xf32> to vector<32x128xf32>
    %c0_3 = arith.constant 0 : index
    %c0_4 = arith.constant 0 : index
    %c0_5 = arith.constant 0 : index
    %6 = vector.load %arg1[%c0_3, %c0_4, %c0_5] : memref<2x16x128xf32, #tpu.memory_space<vmem>>, vector<2x16x128xf32>
    %7 = vector.extract_strided_slice %6 {offsets = [0, 15, 0], sizes = [2, 1, 128], strides = [1, 1, 1]} : vector<2x16x128xf32> to vector<2x1x128xf32>
    %8 = vector.extract_strided_slice %6 {offsets = [0, 0, 0], sizes = [2, 15, 128], strides = [1, 1, 1]} : vector<2x16x128xf32> to vector<2x15x128xf32>
    %9 = tpu.concatenate %7, %8 in 1 : vector<2x1x128xf32>, vector<2x15x128xf32> -> vector<2x16x128xf32>
    %10 = vector.extract_strided_slice %6 {offsets = [0, 1, 0], sizes = [2, 15, 128], strides = [1, 1, 1]} : vector<2x16x128xf32> to vector<2x15x128xf32>
    %11 = vector.extract_strided_slice %6 {offsets = [0, 0, 0], sizes = [2, 1, 128], strides = [1, 1, 1]} : vector<2x16x128xf32> to vector<2x1x128xf32>
    %12 = tpu.concatenate %10, %11 in 1 : vector<2x15x128xf32>, vector<2x1x128xf32> -> vector<2x16x128xf32>
    %13 = tpu.concatenate %9, %6, %12 in 2 : vector<2x16x128xf32>, vector<2x16x128xf32>, vector<2x16x128xf32> -> vector<2x16x384xf32>
    %14 = vector.shape_cast %13 : vector<2x16x384xf32> to vector<32x384xf32>
    %15 = arith.truncf %14 : vector<32x384xf32> to vector<32x384xbf16>
    %c0_6 = arith.constant 0 : index
    %c0_7 = arith.constant 0 : index
    %16 = vector.load %arg2[%c0_6, %c0_7] : memref<384x128xbf16, #tpu.memory_space<vmem>>, vector<384x128xbf16>
    %cst = arith.constant dense<0.000000e+00> : vector<32x128xf32>
    %17 = tpu.matmul %15, %16, %cst {dimension_numbers = #tpu.dot_dimension_numbers<[1], [0], [0], [1], [0, 0, 1, 1], [], []>} : vector<32x384xbf16>, vector<384x128xbf16>, vector<32x128xf32> -> vector<32x128xf32>
    %18 = arith.addf %2, %17 : vector<32x128xf32>
    %19 = vector.shape_cast %18 : vector<32x128xf32> to vector<2x16x128xf32>
    %cst_8 = arith.constant 0.000000e+00 : f32
    %20 = vector.broadcast %cst_8 : f32 to vector<2x16x128xf32>
    %21 = arith.maximumf %19, %20 : vector<2x16x128xf32>
    %22 = vector.extract_strided_slice %21 {offsets = [0, 15, 0], sizes = [2, 1, 128], strides = [1, 1, 1]} : vector<2x16x128xf32> to vector<2x1x128xf32>
    %23 = vector.extract_strided_slice %21 {offsets = [0, 0, 0], sizes = [2, 15, 128], strides = [1, 1, 1]} : vector<2x16x128xf32> to vector<2x15x128xf32>
    %24 = tpu.concatenate %22, %23 in 1 : vector<2x1x128xf32>, vector<2x15x128xf32> -> vector<2x16x128xf32>
    %25 = vector.extract_strided_slice %21 {offsets = [0, 1, 0], sizes = [2, 15, 128], strides = [1, 1, 1]} : vector<2x16x128xf32> to vector<2x15x128xf32>
    %26 = vector.extract_strided_slice %21 {offsets = [0, 0, 0], sizes = [2, 1, 128], strides = [1, 1, 1]} : vector<2x16x128xf32> to vector<2x1x128xf32>
    %27 = tpu.concatenate %25, %26 in 1 : vector<2x15x128xf32>, vector<2x1x128xf32> -> vector<2x16x128xf32>
    %28 = tpu.concatenate %24, %21, %27 in 2 : vector<2x16x128xf32>, vector<2x16x128xf32>, vector<2x16x128xf32> -> vector<2x16x384xf32>
    %29 = vector.shape_cast %28 : vector<2x16x384xf32> to vector<32x384xf32>
    %30 = arith.truncf %29 : vector<32x384xf32> to vector<32x384xbf16>
    %c0_9 = arith.constant 0 : index
    %c0_10 = arith.constant 0 : index
    %31 = vector.load %arg4[%c0_9, %c0_10] : memref<384x128xbf16, #tpu.memory_space<vmem>>, vector<384x128xbf16>
    %cst_11 = arith.constant dense<0.000000e+00> : vector<32x128xf32>
    %32 = tpu.matmul %30, %31, %cst_11 {dimension_numbers = #tpu.dot_dimension_numbers<[1], [0], [0], [1], [0, 0, 1, 1], [], []>} : vector<32x384xbf16>, vector<384x128xbf16>, vector<32x128xf32> -> vector<32x128xf32>
    %33 = arith.addf %5, %32 : vector<32x128xf32>
    %34 = vector.shape_cast %33 : vector<32x128xf32> to vector<2x16x128xf32>
    %35 = arith.addf %34, %6 : vector<2x16x128xf32>
    %cst_12 = arith.constant 0.000000e+00 : f32
    %36 = vector.broadcast %cst_12 : f32 to vector<2x16x128xf32>
    %37 = arith.maximumf %35, %36 : vector<2x16x128xf32>
    %38 = vector.extract_strided_slice %37 {offsets = [0, 15, 0], sizes = [2, 1, 128], strides = [1, 1, 1]} : vector<2x16x128xf32> to vector<2x1x128xf32>
    %39 = vector.extract_strided_slice %37 {offsets = [0, 0, 0], sizes = [2, 15, 128], strides = [1, 1, 1]} : vector<2x16x128xf32> to vector<2x15x128xf32>
    %40 = tpu.concatenate %38, %39 in 1 : vector<2x1x128xf32>, vector<2x15x128xf32> -> vector<2x16x128xf32>
    %41 = vector.extract_strided_slice %37 {offsets = [0, 1, 0], sizes = [2, 15, 128], strides = [1, 1, 1]} : vector<2x16x128xf32> to vector<2x15x128xf32>
    %42 = vector.extract_strided_slice %37 {offsets = [0, 0, 0], sizes = [2, 1, 128], strides = [1, 1, 1]} : vector<2x16x128xf32> to vector<2x1x128xf32>
    %43 = tpu.concatenate %41, %42 in 1 : vector<2x15x128xf32>, vector<2x1x128xf32> -> vector<2x16x128xf32>
    %44 = tpu.concatenate %40, %37, %43 in 2 : vector<2x16x128xf32>, vector<2x16x128xf32>, vector<2x16x128xf32> -> vector<2x16x384xf32>
    %45 = vector.shape_cast %44 : vector<2x16x384xf32> to vector<32x384xf32>
    %46 = arith.truncf %45 : vector<32x384xf32> to vector<32x384xbf16>
    %c0_13 = arith.constant 0 : index
    %c0_14 = arith.constant 0 : index
    %47 = vector.load %arg2[%c0_13, %c0_14] : memref<384x128xbf16, #tpu.memory_space<vmem>>, vector<384x128xbf16>
    %cst_15 = arith.constant dense<0.000000e+00> : vector<32x128xf32>
    %48 = tpu.matmul %46, %47, %cst_15 {dimension_numbers = #tpu.dot_dimension_numbers<[1], [0], [0], [1], [0, 0, 1, 1], [], []>} : vector<32x384xbf16>, vector<384x128xbf16>, vector<32x128xf32> -> vector<32x128xf32>
    %49 = arith.addf %2, %48 : vector<32x128xf32>
    %50 = vector.shape_cast %49 : vector<32x128xf32> to vector<2x16x128xf32>
    %cst_16 = arith.constant 0.000000e+00 : f32
    %51 = vector.broadcast %cst_16 : f32 to vector<2x16x128xf32>
    %52 = arith.maximumf %50, %51 : vector<2x16x128xf32>
    %53 = vector.extract_strided_slice %52 {offsets = [0, 15, 0], sizes = [2, 1, 128], strides = [1, 1, 1]} : vector<2x16x128xf32> to vector<2x1x128xf32>
    %54 = vector.extract_strided_slice %52 {offsets = [0, 0, 0], sizes = [2, 15, 128], strides = [1, 1, 1]} : vector<2x16x128xf32> to vector<2x15x128xf32>
    %55 = tpu.concatenate %53, %54 in 1 : vector<2x1x128xf32>, vector<2x15x128xf32> -> vector<2x16x128xf32>
    %56 = vector.extract_strided_slice %52 {offsets = [0, 1, 0], sizes = [2, 15, 128], strides = [1, 1, 1]} : vector<2x16x128xf32> to vector<2x15x128xf32>
    %57 = vector.extract_strided_slice %52 {offsets = [0, 0, 0], sizes = [2, 1, 128], strides = [1, 1, 1]} : vector<2x16x128xf32> to vector<2x1x128xf32>
    %58 = tpu.concatenate %56, %57 in 1 : vector<2x15x128xf32>, vector<2x1x128xf32> -> vector<2x16x128xf32>
    %59 = tpu.concatenate %55, %52, %58 in 2 : vector<2x16x128xf32>, vector<2x16x128xf32>, vector<2x16x128xf32> -> vector<2x16x384xf32>
    %60 = vector.shape_cast %59 : vector<2x16x384xf32> to vector<32x384xf32>
    %61 = arith.truncf %60 : vector<32x384xf32> to vector<32x384xbf16>
    %c0_17 = arith.constant 0 : index
    %c0_18 = arith.constant 0 : index
    %62 = vector.load %arg4[%c0_17, %c0_18] : memref<384x128xbf16, #tpu.memory_space<vmem>>, vector<384x128xbf16>
    %cst_19 = arith.constant dense<0.000000e+00> : vector<32x128xf32>
    %63 = tpu.matmul %61, %62, %cst_19 {dimension_numbers = #tpu.dot_dimension_numbers<[1], [0], [0], [1], [0, 0, 1, 1], [], []>} : vector<32x384xbf16>, vector<384x128xbf16>, vector<32x128xf32> -> vector<32x128xf32>
    %64 = arith.addf %5, %63 : vector<32x128xf32>
    %65 = vector.shape_cast %64 : vector<32x128xf32> to vector<2x16x128xf32>
    %66 = arith.addf %65, %37 : vector<2x16x128xf32>
    %cst_20 = arith.constant 0.000000e+00 : f32
    %67 = vector.broadcast %cst_20 : f32 to vector<2x16x128xf32>
    %68 = arith.maximumf %66, %67 : vector<2x16x128xf32>
    %c0_21 = arith.constant 0 : index
    %c0_22 = arith.constant 0 : index
    %c0_23 = arith.constant 0 : index
    %69 = vector.load %arg6[%c0_21, %c0_22, %c0_23] : memref<2x16x128xf32, #tpu.memory_space<vmem>>, vector<2x16x128xf32>
    tpu.vector_store %arg6[%c0_21, %c0_22, %c0_23], %68 {strides = array<i32>} : memref<2x16x128xf32, #tpu.memory_space<vmem>>, vector<2x16x128xf32>,
    return
  }
  func.func @transform_0(%arg0: i32) -> (i32, i32, i32) {
    %c0_i32 = arith.constant 0 : i32
    %c0_i32_0 = arith.constant 0 : i32
    %c0_i32_1 = arith.constant 0 : i32
    return %arg0, %c0_i32, %c0_i32_0 : i32, i32, i32
  }
  func.func @transform_1(%arg0: i32) -> (i32, i32) {
    %c0_i32 = arith.constant 0 : i32
    %c0_i32_0 = arith.constant 0 : i32
    %c0_i32_1 = arith.constant 0 : i32
    return %c0_i32, %c0_i32_0 : i32, i32
  }
  func.func @transform_2(%arg0: i32) -> (i32, i32) {
    %c0_i32 = arith.constant 0 : i32
    %c0_i32_0 = arith.constant 0 : i32
    %c0_i32_1 = arith.constant 0 : i32
    return %c0_i32, %c0_i32_0 : i32, i32
  }
  func.func @transform_3(%arg0: i32) -> (i32, i32) {
    %c0_i32 = arith.constant 0 : i32
    %c0_i32_0 = arith.constant 0 : i32
    %c0_i32_1 = arith.constant 0 : i32
    return %c0_i32, %c0_i32_0 : i32, i32
  }
  func.func @transform_4(%arg0: i32) -> (i32, i32) {
    %c0_i32 = arith.constant 0 : i32
    %c0_i32_0 = arith.constant 0 : i32
    %c0_i32_1 = arith.constant 0 : i32
    return %c0_i32, %c0_i32_0 : i32, i32
  }
  func.func @transform_5(%arg0: i32) -> (i32, i32, i32) {
    %c0_i32 = arith.constant 0 : i32
    %c0_i32_0 = arith.constant 0 : i32
    %c0_i32_1 = arith.constant 0 : i32
    return %arg0, %c0_i32, %c0_i32_0 : i32, i32, i32
  }
}

</mosaic_0001>

<llo_original>
// kernel: residual_block_nd.1
$region0: #{residual_block_nd.1}
  #allocation0 [shape = 'u32[]', space=smem, size = 0x4, offset = 0x4, fixed_abs, tag = 'smem constant byte address 0x4 - core index']
  #allocation1 [shape = 'u32[72,128]{1,0:T(1,128)}', space=vmem, size = 0x9000, scoped, tag = 'internal scratch']
  %s0 = inlined_call_operand.vmem [shape: f32[2,16,128], index: 0, kind: input, shape index: {}]
  %s1 = inlined_call_operand.vmem [shape: bf16[384,128], index: 1, kind: input, shape index: {}]
  %s2 = inlined_call_operand.vmem [shape: f32[1,128], index: 2, kind: input, shape index: {}]
  %s3 = inlined_call_operand.vmem [shape: bf16[384,128], index: 3, kind: input, shape index: {}]
  %s4 = inlined_call_operand.vmem [shape: f32[1,128], index: 4, kind: input, shape index: {}]
  %s5 = inlined_call_operand.vmem [shape: f32[2,16,128], index: 5, kind: output, shape index: {}]
  %s6 = sld [smem:[#allocation0]]
  $region30: #{residual_block_nd.1} parent=0
    _
  %s8 = ssub.s32 1, %s6
  %s9 = scalar_select 0, %s8, %s6
  // Predicated region
  $region2: #{residual_block_nd.1} parent=0 // pred_check
    _
  $region3: #{residual_block_nd.1} parent=0 // pred_check_branch
    %11 = sbr.rel (0) target = $region5
  $region4: #{residual_block_nd.1} parent=0 // pred_region
    _
  $region5: #{residual_block_nd.1} parent=0 // pred_fallthru
    _
  // Predicated region
  $region6: #{residual_block_nd.1} parent=0 // pred_check
    _
  $region7: #{residual_block_nd.1} parent=0 // pred_check_branch
    %13 = sbr.rel (0) target = $region9
  $region8: #{residual_block_nd.1} parent=0 // pred_region
    _
  $region9: #{residual_block_nd.1} parent=0 // pred_fallthru
    _
  // Predicated region
  $region10: #{residual_block_nd.1} parent=0 // pred_check
    _
  $region11: #{residual_block_nd.1} parent=0 // pred_check_branch
    %15 = sbr.rel (0) target = $region13
  $region12: #{residual_block_nd.1} parent=0 // pred_region
    _
  $region13: #{residual_block_nd.1} parent=0 // pred_fallthru
    _
  // Predicated region
  $region14: #{residual_block_nd.1} parent=0 // pred_check
    _
  $region15: #{residual_block_nd.1} parent=0 // pred_check_branch
    %17 = sbr.rel (0) target = $region17
  $region16: #{residual_block_nd.1} parent=0 // pred_region
    _
  $region17: #{residual_block_nd.1} parent=0 // pred_fallthru
    _
  // Predicated region
  $region18: #{residual_block_nd.1} parent=0 // pred_check
    _
  $region19: #{residual_block_nd.1} parent=0 // pred_check_branch
    %19 = sbr.rel (0) target = $region21
  $region20: #{residual_block_nd.1} parent=0 // pred_region
    _
  $region21: #{residual_block_nd.1} parent=0 // pred_fallthru
    _
  %v20 = vld [vmem:[%s2] sm:$0x1]
  %v22 = vperm.slane %v20, 0
  %v24 = vld [vmem:[%s4] sm:$0x1]
  %v26 = vperm.slane %v24, 0
  %v28 = vld [vmem:[%s0] sm:$0xff]
  %v29 = vld [vmem:[%s0 + $0x8] sm:$0xff]
  %v30 = vld [vmem:[%s0 + $0x10] sm:$0xff]
  %v31 = vld [vmem:[%s0 + $0x18] sm:$0xff]
  %v34 = vrot.slane %v29, 7
  %v35 = vrot.slane %v31, 7
  %vm40 = vcmask 1040384
  %v41 = vrot.slane %v28, 7
  %v42 = vsel %vm40, %v41, %v34
  %v43 = vrot.slane %v30, 7
  %v44 = vsel %vm40, %v43, %v35
  %v49 = vsel %vm40, %v34, %v41
  %v50 = vsel %vm40, %v35, %v43
  %vm51 = vcmask 1046528
  %v52 = vrot.slane %v28, 1
  %v53 = vrot.slane %v29, 1
  %v54 = vsel %vm51, %v52, %v53
  %v55 = vrot.slane %v30, 1
  %v56 = vrot.slane %v31, 1
  %v57 = vsel %vm51, %v55, %v56
  %v64 = vsel %vm51, %v53, %v52
  %v65 = vsel %vm51, %v56, %v55
  %v66 = vpack.c.bf16 %v42, %v49
  %v67 = vpack.c.bf16 %v29, %v28
  %v68 = vpack.c.bf16 %v64, %v54
  %v69 = vpack.c.bf16 %v44, %v50
  %v70 = vpack.c.bf16 %v31, %v30
  %v71 = vpack.c.bf16 %v65, %v57
  %v72 = vld [vmem:[%s1] sm:$0xf]
  %v73 = vld [vmem:[%s1 + $0x4] sm:$0xf]
  %v74 = vld [vmem:[%s1 + $0x8] sm:$0xf]
  %v75 = vld [vmem:[%s1 + $0xc] sm:$0xf]
  %v76 = vld [vmem:[%s1 + $0x10] sm:$0xf]
  %v77 = vld [vmem:[%s1 + $0x14] sm:$0xf]
  %v78 = vld [vmem:[%s1 + $0x18] sm:$0xf]
  %v79 = vld [vmem:[%s1 + $0x1c] sm:$0xf]
  %v80 = vld [vmem:[%s1 + $0x20] sm:$0xf]
  %v81 = vld [vmem:[%s1 + $0x24] sm:$0xf]
  %v82 = vld [vmem:[%s1 + $0x28] sm:$0xf]
  %v83 = vld [vmem:[%s1 + $0x2c] sm:$0xf]
  %v84 = vld [vmem:[%s1 + $0x30] sm:$0xf]
  %v85 = vld [vmem:[%s1 + $0x34] sm:$0xf]
  %v86 = vld [vmem:[%s1 + $0x38] sm:$0xf]
  %v87 = vld [vmem:[%s1 + $0x3c] sm:$0xf]
  %v88 = vld [vmem:[%s1 + $0x40] sm:$0xf]
  %v89 = vld [vmem:[%s1 + $0x44] sm:$0xf]
  %v90 = vld [vmem:[%s1 + $0x48] sm:$0xf]
  %v91 = vld [vmem:[%s1 + $0x4c] sm:$0xf]
  %v92 = vld [vmem:[%s1 + $0x50] sm:$0xf]
  %v93 = vld [vmem:[%s1 + $0x54] sm:$0xf]
  %v94 = vld [vmem:[%s1 + $0x58] sm:$0xf]
  %v95 = vld [vmem:[%s1 + $0x5c] sm:$0xf]
  %v96 = vld [vmem:[%s1 + $0x60] sm:$0xf]
  %v97 = vld [vmem:[%s1 + $0x64] sm:$0xf]
  %v98 = vld [vmem:[%s1 + $0x68] sm:$0xf]
  %v99 = vld [vmem:[%s1 + $0x6c] sm:$0xf]
  %v100 = vld [vmem:[%s1 + $0x70] sm:$0xf]
  %v101 = vld [vmem:[%s1 + $0x74] sm:$0xf]
  %v102 = vld [vmem:[%s1 + $0x78] sm:$0xf]
  %v103 = vld [vmem:[%s1 + $0x7c] sm:$0xf]
  %v104 = vld [vmem:[%s1 + $0x80] sm:$0xf]
  %v105 = vld [vmem:[%s1 + $0x84] sm:$0xf]
  %v106 = vld [vmem:[%s1 + $0x88] sm:$0xf]
  %v107 = vld [vmem:[%s1 + $0x8c] sm:$0xf]
  %v108 = vld [vmem:[%s1 + $0x90] sm:$0xf]
  %v109 = vld [vmem:[%s1 + $0x94] sm:$0xf]
  %v110 = vld [vmem:[%s1 + $0x98] sm:$0xf]
  %v111 = vld [vmem:[%s1 + $0x9c] sm:$0xf]
  %v112 = vld [vmem:[%s1 + $0xa0] sm:$0xf]
  %v113 = vld [vmem:[%s1 + $0xa4] sm:$0xf]
  %v114 = vld [vmem:[%s1 + $0xa8] sm:$0xf]
  %v115 = vld [vmem:[%s1 + $0xac] sm:$0xf]
  %v116 = vld [vmem:[%s1 + $0xb0] sm:$0xf]
  %v117 = vld [vmem:[%s1 + $0xb4] sm:$0xf]
  %v118 = vld [vmem:[%s1 + $0xb8] sm:$0xf]
  %v119 = vld [vmem:[%s1 + $0xbc] sm:$0xf]
  %v168 = vunpack.c.l.b16 %v72
  %v169 = vunpack.c.l.b16 %v73
  %v170 = vunpack.c.l.b16 %v74
  %v171 = vunpack.c.l.b16 %v75
  %v172 = vunpack.c.l.b16 %v76
  %v173 = vunpack.c.l.b16 %v77
  %v174 = vunpack.c.l.b16 %v78
  %v175 = vunpack.c.l.b16 %v79
  %v176 = vunpack.c.l.b16 %v80
  %v177 = vunpack.c.l.b16 %v81
  %v178 = vunpack.c.l.b16 %v82
  %v179 = vunpack.c.l.b16 %v83
  %v180 = vunpack.c.l.b16 %v84
  %v181 = vunpack.c.l.b16 %v85
  %v182 = vunpack.c.l.b16 %v86
  %v183 = vunpack.c.l.b16 %v87
  %v184 = vunpack.c.l.b16 %v88
  %v185 = vunpack.c.l.b16 %v89
  %v186 = vunpack.c.l.b16 %v90
  %v187 = vunpack.c.l.b16 %v91
  %v188 = vunpack.c.l.b16 %v92
  %v189 = vunpack.c.l.b16 %v93
  %v190 = vunpack.c.l.b16 %v94
  %v191 = vunpack.c.l.b16 %v95
  %v192 = vunpack.c.l.b16 %v96
  %v193 = vunpack.c.l.b16 %v97
  %v194 = vunpack.c.l.b16 %v98
  %v195 = vunpack.c.l.b16 %v99
  %v196 = vunpack.c.l.b16 %v100
  %v197 = vunpack.c.l.b16 %v101
  %v198 = vunpack.c.l.b16 %v102
  %v199 = vunpack.c.l.b16 %v103
  %v200 = vunpack.c.l.b16 %v104
  %v201 = vunpack.c.l.b16 %v105
  %v202 = vunpack.c.l.b16 %v106
  %v203 = vunpack.c.l.b16 %v107
  %v204 = vunpack.c.l.b16 %v108
  %v205 = vunpack.c.l.b16 %v109
  %v206 = vunpack.c.l.b16 %v110
  %v207 = vunpack.c.l.b16 %v111
  %v208 = vunpack.c.l.b16 %v112
  %v209 = vunpack.c.l.b16 %v113
  %v210 = vunpack.c.l.b16 %v114
  %v211 = vunpack.c.l.b16 %v115
  %v212 = vunpack.c.l.b16 %v116
  %v213 = vunpack.c.l.b16 %v117
  %v214 = vunpack.c.l.b16 %v118
  %v215 = vunpack.c.l.b16 %v119
  %v216 = vpack.c.b16 %v169, %v168
  %v217 = vpack.c.b16 %v171, %v170
  %v218 = vpack.c.b16 %v173, %v172
  %v219 = vpack.c.b16 %v175, %v174
  %v220 = vpack.c.b16 %v177, %v176
  %v221 = vpack.c.b16 %v179, %v178
  %v222 = vpack.c.b16 %v181, %v180
  %v223 = vpack.c.b16 %v183, %v182
  %v224 = vpack.c.b16 %v185, %v184
  %v225 = vpack.c.b16 %v187, %v186
  %v226 = vpack.c.b16 %v189, %v188
  %v227 = vpack.c.b16 %v191, %v190
  %v228 = vpack.c.b16 %v193, %v192
  %v229 = vpack.c.b16 %v195, %v194
  %v230 = vpack.c.b16 %v197, %v196
  %v231 = vpack.c.b16 %v199, %v198
  %v232 = vpack.c.b16 %v201, %v200
  %v233 = vpack.c.b16 %v203, %v202
  %v234 = vpack.c.b16 %v205, %v204
  %v235 = vpack.c.b16 %v207, %v206
  %v236 = vpack.c.b16 %v209, %v208
  %v237 = vpack.c.b16 %v211, %v210
  %v238 = vpack.c.b16 %v213, %v212
  %v239 = vpack.c.b16 %v215, %v214
  %264 = vmatpush.bf16.msra.mxu0 %v223
  %265 = vmatpush.bf16.msra.mxu0 %v222
  %266 = vmatpush.bf16.msra.mxu0 %v221
  %267 = vmatpush.bf16.msra.mxu0 %v220
  %268 = vmatpush.bf16.msra.mxu0 %v219
  %269 = vmatpush.bf16.msra.mxu0 %v218
  %270 = vmatpush.bf16.msra.mxu0 %v217
  %271 = vmatpush.bf16.msra.mxu0 %v216
  %272 = vmatmul.bf16.gmra.mxu0 %v66
  %v273 = vpop.f32.mrf.mxu0
  %v274 = vadd.f32 0.0, %v273
  %v275 = vpop.f32.mrf.mxu0
  %v276 = vadd.f32 0.0, %v275
  %277 = vmatmul.bf16.gmra.mxu0 %v69
  %v278 = vpop.f32.mrf.mxu0
  %v279 = vadd.f32 0.0, %v278
  %v280 = vpop.f32.mrf.mxu0
  %v281 = vadd.f32 0.0, %v280
  %282 = vdwg.mxu0
  %283 = vmatpush.bf16.msra.mxu0 %v231
  %284 = vmatpush.bf16.msra.mxu0 %v230
  %285 = vmatpush.bf16.msra.mxu0 %v229
  %286 = vmatpush.bf16.msra.mxu0 %v228
  %287 = vmatpush.bf16.msra.mxu0 %v227
  %288 = vmatpush.bf16.msra.mxu0 %v226
  %289 = vmatpush.bf16.msra.mxu0 %v225
  %290 = vmatpush.bf16.msra.mxu0 %v224
  %291 = vmatmul.bf16.gmra.mxu0 %v67
  %v292 = vpop.f32.mrf.mxu0
  %v293 = vadd.f32 %v274, %v292
  %v294 = vpop.f32.mrf.mxu0
  %v295 = vadd.f32 %v276, %v294
  %296 = vmatmul.bf16.gmra.mxu0 %v70
  %v297 = vpop.f32.mrf.mxu0
  %v298 = vadd.f32 %v279, %v297
  %v299 = vpop.f32.mrf.mxu0
  %v300 = vadd.f32 %v281, %v299
  %301 = vdwg.mxu0
  %302 = vmatpush.bf16.msra.mxu0 %v239
  %303 = vmatpush.bf16.msra.mxu0 %v238
  %304 = vmatpush.bf16.msra.mxu0 %v237
  %305 = vmatpush.bf16.msra.mxu0 %v236
  %306 = vmatpush.bf16.msra.mxu0 %v235
  %307 = vmatpush.bf16.msra.mxu0 %v234
  %308 = vmatpush.bf16.msra.mxu0 %v233
  %309 = vmatpush.bf16.msra.mxu0 %v232
  %310 = vmatmul.bf16.gmra.mxu0 %v68
  %v311 = vpop.f32.mrf.mxu0
  %v312 = vadd.f32 %v293, %v311
  %v313 = vpop.f32.mrf.mxu0
  %v314 = vadd.f32 %v295, %v313
  %315 = vmatmul.bf16.gmra.mxu0 %v71
  %v316 = vpop.f32.mrf.mxu0
  %v317 = vadd.f32 %v298, %v316
  %v318 = vpop.f32.mrf.mxu0
  %v319 = vadd.f32 %v300, %v318
  %320 = vdwg.mxu0
  %v321 = vadd.f32 %v22, %v312
  %v322 = vadd.f32 %v22, %v314
  %v323 = vadd.f32 %v22, %v317
  %v324 = vadd.f32 %v22, %v319
  %v325 = vmax.f32 %v321, 0.0
  %v326 = vmax.f32 %v322, 0.0
  %v327 = vmax.f32 %v323, 0.0
  %v328 = vmax.f32 %v324, 0.0
  %v331 = vrot.slane %v326, 7
  %v332 = vrot.slane %v328, 7
  %v337 = vrot.slane %v325, 7
  %v338 = vsel %vm40, %v337, %v331
  %v339 = vrot.slane %v327, 7
  %v340 = vsel %vm40, %v339, %v332
  %v345 = vsel %vm40, %v331, %v337
  %v346 = vsel %vm40, %v332, %v339
  %v347 = vrot.slane %v325, 1
  %v348 = vrot.slane %v326, 1
  %v349 = vsel %vm51, %v347, %v348
  %v350 = vrot.slane %v327, 1
  %v351 = vrot.slane %v328, 1
  %v352 = vsel %vm51, %v350, %v351
  %v359 = vsel %vm51, %v348, %v347
  %v360 = vsel %vm51, %v351, %v350
  %v361 = vpack.c.bf16 %v338, %v345
  %v362 = vpack.c.bf16 %v326, %v325
  %v363 = vpack.c.bf16 %v359, %v349
  %v364 = vpack.c.bf16 %v340, %v346
  %v365 = vpack.c.bf16 %v328, %v327
  %v366 = vpack.c.bf16 %v360, %v352
  %v367 = vld [vmem:[%s3] sm:$0xf]
  %v368 = vld [vmem:[%s3 + $0x4] sm:$0xf]
  %v369 = vld [vmem:[%s3 + $0x8] sm:$0xf]
  %v370 = vld [vmem:[%s3 + $0xc] sm:$0xf]
  %v371 = vld [vmem:[%s3 + $0x10] sm:$0xf]
  %v372 = vld [vmem:[%s3 + $0x14] sm:$0xf]
  %v373 = vld [vmem:[%s3 + $0x18] sm:$0xf]
  %v374 = vld [vmem:[%s3 + $0x1c] sm:$0xf]
  %v375 = vld [vmem:[%s3 + $0x20] sm:$0xf]
  %v376 = vld [vmem:[%s3 + $0x24] sm:$0xf]
  %v377 = vld [vmem:[%s3 + $0x28] sm:$0xf]
  %v378 = vld [vmem:[%s3 + $0x2c] sm:$0xf]
  %v379 = vld [vmem:[%s3 + $0x30] sm:$0xf]
  %v380 = vld [vmem:[%s3 + $0x34] sm:$0xf]
  %v381 = vld [vmem:[%s3 + $0x38] sm:$0xf]
  %v382 = vld [vmem:[%s3 + $0x3c] sm:$0xf]
  %v383 = vld [vmem:[%s3 + $0x40] sm:$0xf]
  %v384 = vld [vmem:[%s3 + $0x44] sm:$0xf]
  %v385 = vld [vmem:[%s3 + $0x48] sm:$0xf]
  %v386 = vld [vmem:[%s3 + $0x4c] sm:$0xf]
  %v387 = vld [vmem:[%s3 + $0x50] sm:$0xf]
  %v388 = vld [vmem:[%s3 + $0x54] sm:$0xf]
  %v389 = vld [vmem:[%s3 + $0x58] sm:$0xf]
  %v390 = vld [vmem:[%s3 + $0x5c] sm:$0xf]
  %v391 = vld [vmem:[%s3 + $0x60] sm:$0xf]
  %v392 = vld [vmem:[%s3 + $0x64] sm:$0xf]
  %v393 = vld [vmem:[%s3 + $0x68] sm:$0xf]
  %v394 = vld [vmem:[%s3 + $0x6c] sm:$0xf]
  %v395 = vld [vmem:[%s3 + $0x70] sm:$0xf]
  %v396 = vld [vmem:[%s3 + $0x74] sm:$0xf]
  %v397 = vld [vmem:[%s3 + $0x78] sm:$0xf]
  %v398 = vld [vmem:[%s3 + $0x7c] sm:$0xf]
  %v399 = vld [vmem:[%s3 + $0x80] sm:$0xf]
  %v400 = vld [vmem:[%s3 + $0x84] sm:$0xf]
  %v401 = vld [vmem:[%s3 + $0x88] sm:$0xf]
  %v402 = vld [vmem:[%s3 + $0x8c] sm:$0xf]
  %v403 = vld [vmem:[%s3 + $0x90] sm:$0xf]
  %v404 = vld [vmem:[%s3 + $0x94] sm:$0xf]
  %v405 = vld [vmem:[%s3 + $0x98] sm:$0xf]
  %v406 = vld [vmem:[%s3 + $0x9c] sm:$0xf]
  %v407 = vld [vmem:[%s3 + $0xa0] sm:$0xf]
  %v408 = vld [vmem:[%s3 + $0xa4] sm:$0xf]
  %v409 = vld [vmem:[%s3 + $0xa8] sm:$0xf]
  %v410 = vld [vmem:[%s3 + $0xac] sm:$0xf]
  %v411 = vld [vmem:[%s3 + $0xb0] sm:$0xf]
  %v412 = vld [vmem:[%s3 + $0xb4] sm:$0xf]
  %v413 = vld [vmem:[%s3 + $0xb8] sm:$0xf]
  %v414 = vld [vmem:[%s3 + $0xbc] sm:$0xf]
  %v463 = vunpack.c.l.b16 %v367
  %v464 = vunpack.c.l.b16 %v368
  %v465 = vunpack.c.l.b16 %v369
  %v466 = vunpack.c.l.b16 %v370
  %v467 = vunpack.c.l.b16 %v371
  %v468 = vunpack.c.l.b16 %v372
  %v469 = vunpack.c.l.b16 %v373
  %v470 = vunpack.c.l.b16 %v374
  %v471 = vunpack.c.l.b16 %v375
  %v472 = vunpack.c.l.b16 %v376
  %v473 = vunpack.c.l.b16 %v377
  %v474 = vunpack.c.l.b16 %v378
  %v475 = vunpack.c.l.b16 %v379
  %v476 = vunpack.c.l.b16 %v380
  %v477 = vunpack.c.l.b16 %v381
  %v478 = vunpack.c.l.b16 %v382
  %v479 = vunpack.c.l.b16 %v383
  %v480 = vunpack.c.l.b16 %v384
  %v481 = vunpack.c.l.b16 %v385
  %v482 = vunpack.c.l.b16 %v386
  %v483 = vunpack.c.l.b16 %v387
  %v484 = vunpack.c.l.b16 %v388
  %v485 = vunpack.c.l.b16 %v389
  %v486 = vunpack.c.l.b16 %v390
  %v487 = vunpack.c.l.b16 %v391
  %v488 = vunpack.c.l.b16 %v392
  %v489 = vunpack.c.l.b16 %v393
  %v490 = vunpack.c.l.b16 %v394
  %v491 = vunpack.c.l.b16 %v395
  %v492 = vunpack.c.l.b16 %v396
  %v493 = vunpack.c.l.b16 %v397
  %v494 = vunpack.c.l.b16 %v398
  %v495 = vunpack.c.l.b16 %v399
  %v496 = vunpack.c.l.b16 %v400
  %v497 = vunpack.c.l.b16 %v401
  %v498 = vunpack.c.l.b16 %v402
  %v499 = vunpack.c.l.b16 %v403
  %v500 = vunpack.c.l.b16 %v404
  %v501 = vunpack.c.l.b16 %v405
  %v502 = vunpack.c.l.b16 %v406
  %v503 = vunpack.c.l.b16 %v407
  %v504 = vunpack.c.l.b16 %v408
  %v505 = vunpack.c.l.b16 %v409
  %v506 = vunpack.c.l.b16 %v410
  %v507 = vunpack.c.l.b16 %v411
  %v508 = vunpack.c.l.b16 %v412
  %v509 = vunpack.c.l.b16 %v413
  %v510 = vunpack.c.l.b16 %v414
  %v511 = vpack.c.b16 %v464, %v463
  %v512 = vpack.c.b16 %v466, %v465
  %v513 = vpack.c.b16 %v468, %v467
  %v514 = vpack.c.b16 %v470, %v469
  %v515 = vpack.c.b16 %v472, %v471
  %v516 = vpack.c.b16 %v474, %v473
  %v517 = vpack.c.b16 %v476, %v475
  %v518 = vpack.c.b16 %v478, %v477
  %v519 = vpack.c.b16 %v480, %v479
  %v520 = vpack.c.b16 %v482, %v481
  %v521 = vpack.c.b16 %v484, %v483
  %v522 = vpack.c.b16 %v486, %v485
  %v523 = vpack.c.b16 %v488, %v487
  %v524 = vpack.c.b16 %v490, %v489
  %v525 = vpack.c.b16 %v492, %v491
  %v526 = vpack.c.b16 %v494, %v493
  %v527 = vpack.c.b16 %v496, %v495
  %v528 = vpack.c.b16 %v498, %v497
  %v529 = vpack.c.b16 %v500, %v499
  %v530 = vpack.c.b16 %v502, %v501
  %v531 = vpack.c.b16 %v504, %v503
  %v532 = vpack.c.b16 %v506, %v505
  %v533 = vpack.c.b16 %v508, %v507
  %v534 = vpack.c.b16 %v510, %v509
  %559 = vmatpush.bf16.msra.mxu0 %v518
  %560 = vmatpush.bf16.msra.mxu0 %v517
  %561 = vmatpush.bf16.msra.mxu0 %v516
  %562 = vmatpush.bf16.msra.mxu0 %v515
  %563 = vmatpush.bf16.msra.mxu0 %v514
  %564 = vmatpush.bf16.msra.mxu0 %v513
  %565 = vmatpush.bf16.msra.mxu0 %v512
  %566 = vmatpush.bf16.msra.mxu0 %v511
  %567 = vmatmul.bf16.gmra.mxu0 %v361
  %v568 = vpop.f32.mrf.mxu0
  %v569 = vadd.f32 0.0, %v568
  %v570 = vpop.f32.mrf.mxu0
  %v571 = vadd.f32 0.0, %v570
  %572 = vmatmul.bf16.gmra.mxu0 %v364
  %v573 = vpop.f32.mrf.mxu0
  %v574 = vadd.f32 0.0, %v573
  %v575 = vpop.f32.mrf.mxu0
  %v576 = vadd.f32 0.0, %v575
  %577 = vdwg.mxu0
  %578 = vmatpush.bf16.msra.mxu0 %v526
  %579 = vmatpush.bf16.msra.mxu0 %v525
  %580 = vmatpush.bf16.msra.mxu0 %v524
  %581 = vmatpush.bf16.msra.mxu0 %v523
  %582 = vmatpush.bf16.msra.mxu0 %v522
  %583 = vmatpush.bf16.msra.mxu0 %v521
  %584 = vmatpush.bf16.msra.mxu0 %v520
  %585 = vmatpush.bf16.msra.mxu0 %v519
  %586 = vmatmul.bf16.gmra.mxu0 %v362
  %v587 = vpop.f32.mrf.mxu0
  %v588 = vadd.f32 %v569, %v587
  %v589 = vpop.f32.mrf.mxu0
  %v590 = vadd.f32 %v571, %v589
  %591 = vmatmul.bf16.gmra.mxu0 %v365
  %v592 = vpop.f32.mrf.mxu0
  %v593 = vadd.f32 %v574, %v592
  %v594 = vpop.f32.mrf.mxu0
  %v595 = vadd.f32 %v576, %v594
  %596 = vdwg.mxu0
  %597 = vmatpush.bf16.msra.mxu0 %v534
  %598 = vmatpush.bf16.msra.mxu0 %v533
  %599 = vmatpush.bf16.msra.mxu0 %v532
  %600 = vmatpush.bf16.msra.mxu0 %v531
  %601 = vmatpush.bf16.msra.mxu0 %v530
  %602 = vmatpush.bf16.msra.mxu0 %v529
  %603 = vmatpush.bf16.msra.mxu0 %v528
  %604 = vmatpush.bf16.msra.mxu0 %v527
  %605 = vmatmul.bf16.gmra.mxu0 %v363
  %v606 = vpop.f32.mrf.mxu0
  %v607 = vadd.f32 %v588, %v606
  %v608 = vpop.f32.mrf.mxu0
  %v609 = vadd.f32 %v590, %v608
  %610 = vmatmul.bf16.gmra.mxu0 %v366
  %v611 = vpop.f32.mrf.mxu0
  %v612 = vadd.f32 %v593, %v611
  %v613 = vpop.f32.mrf.mxu0
  %v614 = vadd.f32 %v595, %v613
  %615 = vdwg.mxu0
  %v616 = vadd.f32 %v26, %v607
  %v617 = vadd.f32 %v26, %v609
  %v618 = vadd.f32 %v26, %v612
  %v619 = vadd.f32 %v26, %v614
  %v620 = vadd.f32 %v616, %v28
  %v621 = vadd.f32 %v617, %v29
  %v622 = vadd.f32 %v618, %v30
  %v623 = vadd.f32 %v619, %v31
  %v624 = vmax.f32 %v620, 0.0
  %v625 = vmax.f32 %v621, 0.0
  %v626 = vmax.f32 %v622, 0.0
  %v627 = vmax.f32 %v623, 0.0
  %v630 = vrot.slane %v625, 7
  %v631 = vrot.slane %v627, 7
  %v636 = vrot.slane %v624, 7
  %v637 = vsel %vm40, %v636, %v630
  %v638 = vrot.slane %v626, 7
  %v639 = vsel %vm40, %v638, %v631
  %v644 = vsel %vm40, %v630, %v636
  %v645 = vsel %vm40, %v631, %v638
  %v646 = vrot.slane %v624, 1
  %v647 = vrot.slane %v625, 1
  %v648 = vsel %vm51, %v646, %v647
  %v649 = vrot.slane %v626, 1
  %v650 = vrot.slane %v627, 1
  %v651 = vsel %vm51, %v649, %v650
  %v658 = vsel %vm51, %v647, %v646
  %v659 = vsel %vm51, %v650, %v649
  %v660 = vpack.c.bf16 %v637, %v644
  %v661 = vpack.c.bf16 %v625, %v624
  %v662 = vpack.c.bf16 %v658, %v648
  %v663 = vpack.c.bf16 %v639, %v645
  %v664 = vpack.c.bf16 %v627, %v626
  %v665 = vpack.c.bf16 %v659, %v651
  %666 = vmatpush.bf16.msra.mxu0 %v223
  %667 = vmatpush.bf16.msra.mxu0 %v222
  %668 = vmatpush.bf16.msra.mxu0 %v221
  %669 = vmatpush.bf16.msra.mxu0 %v220
  %670 = vmatpush.bf16.msra.mxu0 %v219
  %671 = vmatpush.bf16.msra.mxu0 %v218
  %672 = vmatpush.bf16.msra.mxu0 %v217
  %673 = vmatpush.bf16.msra.mxu0 %v216
  %674 = vmatmul.bf16.gmra.mxu0 %v660
  %v675 = vpop.f32.mrf.mxu0
  %v676 = vadd.f32 0.0, %v675
  %v677 = vpop.f32.mrf.mxu0
  %v678 = vadd.f32 0.0, %v677
  %679 = vmatmul.bf16.gmra.mxu0 %v663
  %v680 = vpop.f32.mrf.mxu0
  %v681 = vadd.f32 0.0, %v680
  %v682 = vpop.f32.mrf.mxu0
  %v683 = vadd.f32 0.0, %v682
  %684 = vdwg.mxu0
  %685 = vmatpush.bf16.msra.mxu0 %v231
  %686 = vmatpush.bf16.msra.mxu0 %v230
  %687 = vmatpush.bf16.msra.mxu0 %v229
  %688 = vmatpush.bf16.msra.mxu0 %v228
  %689 = vmatpush.bf16.msra.mxu0 %v227
  %690 = vmatpush.bf16.msra.mxu0 %v226
  %691 = vmatpush.bf16.msra.mxu0 %v225
  %692 = vmatpush.bf16.msra.mxu0 %v224
  %693 = vmatmul.bf16.gmra.mxu0 %v661
  %v694 = vpop.f32.mrf.mxu0
  %v695 = vadd.f32 %v676, %v694
  %v696 = vpop.f32.mrf.mxu0
  %v697 = vadd.f32 %v678, %v696
  %698 = vmatmul.bf16.gmra.mxu0 %v664
  %v699 = vpop.f32.mrf.mxu0
  %v700 = vadd.f32 %v681, %v699
  %v701 = vpop.f32.mrf.mxu0
  %v702 = vadd.f32 %v683, %v701
  %703 = vdwg.mxu0
  %704 = vmatpush.bf16.msra.mxu0 %v239
  %705 = vmatpush.bf16.msra.mxu0 %v238
  %706 = vmatpush.bf16.msra.mxu0 %v237
  %707 = vmatpush.bf16.msra.mxu0 %v236
  %708 = vmatpush.bf16.msra.mxu0 %v235
  %709 = vmatpush.bf16.msra.mxu0 %v234
  %710 = vmatpush.bf16.msra.mxu0 %v233
  %711 = vmatpush.bf16.msra.mxu0 %v232
  %712 = vmatmul.bf16.gmra.mxu0 %v662
  %v713 = vpop.f32.mrf.mxu0
  %v714 = vadd.f32 %v695, %v713
  %v715 = vpop.f32.mrf.mxu0
  %v716 = vadd.f32 %v697, %v715
  %717 = vmatmul.bf16.gmra.mxu0 %v665
  %v718 = vpop.f32.mrf.mxu0
  %v719 = vadd.f32 %v700, %v718
  %v720 = vpop.f32.mrf.mxu0
  %v721 = vadd.f32 %v702, %v720
  %722 = vdwg.mxu0
  %v723 = vadd.f32 %v22, %v714
  %v724 = vadd.f32 %v22, %v716
  %v725 = vadd.f32 %v22, %v719
  %v726 = vadd.f32 %v22, %v721
  %v727 = vmax.f32 %v723, 0.0
  %v728 = vmax.f32 %v724, 0.0
  %v729 = vmax.f32 %v725, 0.0
  %v730 = vmax.f32 %v726, 0.0
  %v733 = vrot.slane %v728, 7
  %v734 = vrot.slane %v730, 7
  %v739 = vrot.slane %v727, 7
  %v740 = vsel %vm40, %v739, %v733
  %v741 = vrot.slane %v729, 7
  %v742 = vsel %vm40, %v741, %v734
  %v747 = vsel %vm40, %v733, %v739
  %v748 = vsel %vm40, %v734, %v741
  %v749 = vrot.slane %v727, 1
  %v750 = vrot.slane %v728, 1
  %v751 = vsel %vm51, %v749, %v750
  %v752 = vrot.slane %v729, 1
  %v753 = vrot.slane %v730, 1
  %v754 = vsel %vm51, %v752, %v753
  %v761 = vsel %vm51, %v750, %v749
  %v762 = vsel %vm51, %v753, %v752
  %v763 = vpack.c.bf16 %v740, %v747
  %v764 = vpack.c.bf16 %v728, %v727
  %v765 = vpack.c.bf16 %v761, %v751
  %v766 = vpack.c.bf16 %v742, %v748
  %v767 = vpack.c.bf16 %v730, %v729
  %v768 = vpack.c.bf16 %v762, %v754
  %769 = vmatpush.bf16.msra.mxu0 %v518
  %770 = vmatpush.bf16.msra.mxu0 %v517
  %771 = vmatpush.bf16.msra.mxu0 %v516
  %772 = vmatpush.bf16.msra.mxu0 %v515
  %773 = vmatpush.bf16.msra.mxu0 %v514
  %774 = vmatpush.bf16.msra.mxu0 %v513
  %775 = vmatpush.bf16.msra.mxu0 %v512
  %776 = vmatpush.bf16.msra.mxu0 %v511
  %777 = vmatmul.bf16.gmra.mxu0 %v763
  %v778 = vpop.f32.mrf.mxu0
  %v779 = vadd.f32 0.0, %v778
  %v780 = vpop.f32.mrf.mxu0
  %v781 = vadd.f32 0.0, %v780
  %782 = vmatmul.bf16.gmra.mxu0 %v766
  %v783 = vpop.f32.mrf.mxu0
  %v784 = vadd.f32 0.0, %v783
  %v785 = vpop.f32.mrf.mxu0
  %v786 = vadd.f32 0.0, %v785
  %787 = vdwg.mxu0
  %788 = vmatpush.bf16.msra.mxu0 %v526
  %789 = vmatpush.bf16.msra.mxu0 %v525
  %790 = vmatpush.bf16.msra.mxu0 %v524
  %791 = vmatpush.bf16.msra.mxu0 %v523
  %792 = vmatpush.bf16.msra.mxu0 %v522
  %793 = vmatpush.bf16.msra.mxu0 %v521
  %794 = vmatpush.bf16.msra.mxu0 %v520
  %795 = vmatpush.bf16.msra.mxu0 %v519
  %796 = vmatmul.bf16.gmra.mxu0 %v764
  %v797 = vpop.f32.mrf.mxu0
  %v798 = vadd.f32 %v779, %v797
  %v799 = vpop.f32.mrf.mxu0
  %v800 = vadd.f32 %v781, %v799
  %801 = vmatmul.bf16.gmra.mxu0 %v767
  %v802 = vpop.f32.mrf.mxu0
  %v803 = vadd.f32 %v784, %v802
  %v804 = vpop.f32.mrf.mxu0
  %v805 = vadd.f32 %v786, %v804
  %806 = vdwg.mxu0
  %807 = vmatpush.bf16.msra.mxu0 %v534
  %808 = vmatpush.bf16.msra.mxu0 %v533
  %809 = vmatpush.bf16.msra.mxu0 %v532
  %810 = vmatpush.bf16.msra.mxu0 %v531
  %811 = vmatpush.bf16.msra.mxu0 %v530
  %812 = vmatpush.bf16.msra.mxu0 %v529
  %813 = vmatpush.bf16.msra.mxu0 %v528
  %814 = vmatpush.bf16.msra.mxu0 %v527
  %815 = vmatmul.bf16.gmra.mxu0 %v765
  %v816 = vpop.f32.mrf.mxu0
  %v817 = vadd.f32 %v798, %v816
  %v818 = vpop.f32.mrf.mxu0
  %v819 = vadd.f32 %v800, %v818
  %820 = vmatmul.bf16.gmra.mxu0 %v768
  %v821 = vpop.f32.mrf.mxu0
  %v822 = vadd.f32 %v803, %v821
  %v823 = vpop.f32.mrf.mxu0
  %v824 = vadd.f32 %v805, %v823
  %825 = vdwg.mxu0
  %v826 = vadd.f32 %v26, %v817
  %v827 = vadd.f32 %v26, %v819
  %v828 = vadd.f32 %v26, %v822
  %v829 = vadd.f32 %v26, %v824
  %v830 = vadd.f32 %v826, %v624
  %v831 = vadd.f32 %v827, %v625
  %v832 = vadd.f32 %v828, %v626
  %v833 = vadd.f32 %v829, %v627
  %v834 = vmax.f32 %v830, 0.0
  %v835 = vmax.f32 %v831, 0.0
  %v836 = vmax.f32 %v832, 0.0
  %v837 = vmax.f32 %v833, 0.0
  %838 = vst [vmem:[%s5] sm:$0xff] %v834
  %839 = vst [vmem:[%s5 + $0x8] sm:$0xff] %v835
  %840 = vst [vmem:[%s5 + $0x10] sm:$0xff] %v836
  %841 = vst [vmem:[%s5 + $0x18] sm:$0xff] %v837
  // Predicated region
  $region22: #{residual_block_nd.1} parent=0 // pred_check
    _
  $region23: #{residual_block_nd.1} parent=0 // pred_check_branch
    %843 = sbr.rel (0) target = $region25
  $region24: #{residual_block_nd.1} parent=0 // pred_region
    _
  $region25: #{residual_block_nd.1} parent=0 // pred_fallthru
    _
  // Predicated region
  $region26: #{residual_block_nd.1} parent=0 // pred_check
    _
  $region27: #{residual_block_nd.1} parent=0 // pred_check_branch
    %845 = sbr.rel (0) target = $region29
  $region28: #{residual_block_nd.1} parent=0 // pred_region
    _
  $region29: #{residual_block_nd.1} parent=0 // pred_fallthru
    _

</llo_original>
